<compile_context>
chip_gen: v5e
topology: v5e:2x2
jax: 0.10.0
libtpu: 0.0.40
codegen_flags: <defaults>
</compile_context>

<pallas_src>
import jax
import jax.numpy as jnp
from jax.experimental import pallas as pl
from jax.experimental.pallas import tpu as pltpu


ONEHOT_MAX_VOCAB = 1024  # beyond this the one-hot work (O(T*V*D)) is pure waste


def _round_up(x, m):
    return -(-x // m) * m


def _vmem_capacity_bytes(default=64 << 20):
    """Per-core VMEM capacity; conservative 64 MiB (v7x per-TC) fallback."""
    try:
        cap = getattr(pltpu.get_tpu_info(), "vmem_capacity_bytes", None)
        if cap:
            return int(cap)
    except Exception:
        pass
    return default


# ----------------------------------------------------------------------------
# Path 1: small vocab — table resident in VMEM, one-hot MXU matmul per tile.
# ----------------------------------------------------------------------------

def _embed_onehot_kernel(idx_ref, emb_ref, out_ref):
    """out[t, :] = emb[idx[t], :] for one tile of tokens.

    idx_ref : VMEM [T, 1] int32, emb_ref : VMEM [V, D], out_ref : VMEM [T, D].
    """
    t_tile = out_ref.shape[0]
    vocab = emb_ref.shape[0]
    vocab_ids = jax.lax.broadcasted_iota(jnp.int32, (t_tile, vocab), 1)
    # Cast the (T,V) one-hot to the TABLE dtype (not the table to f32): bf16
    # tables then hit the native bf16 MXU path with f32 accumulation.
    onehot = (idx_ref[...] == vocab_ids).astype(emb_ref.dtype)
    out_ref[...] = jnp.dot(
        onehot, emb_ref[...], preferred_element_type=jnp.float32
    ).astype(out_ref.dtype)


def _onehot_per_token_bytes(vocab, dim, itemsize):
    return (2 * dim * itemsize         # output tile, double-buffered
            + 2 * 128 * 4              # (T,1) i32 idx tile, lane-padded, 2 buffers
            + vocab * (4 + itemsize)   # iota/compare + one-hot-cast temporaries
            + dim * 4)                 # f32 matmul result before the store cast


def _pick_tokens_per_tile(n_tokens, vocab, dim, itemsize, budget_bytes):
    """Largest multiple-of-8 tile (<=512) whose VMEM footprint fits, else None."""
    table_bytes = 2 * vocab * dim * itemsize  # blocked spec allocates 2 buffers
    avail = budget_bytes - table_bytes
    if avail <= 0:
        return None
    t = avail // _onehot_per_token_bytes(vocab, dim, itemsize)
    t = min(512, t, _round_up(n_tokens, 8))
    t = (t // 8) * 8
    return int(t) if t >= 8 else None


def _word_embedding_onehot(idx, emb_table, tokens_per_tile, vmem_limit_bytes):
    bsz, seqlen = idx.shape
    vocab, dim = emb_table.shape
    n_tokens = bsz * seqlen

    idx_col = idx.reshape(n_tokens, 1).astype(jnp.int32)
    grid = (pl.cdiv(n_tokens, tokens_per_tile),)

    out = pl.pallas_call(
        _embed_onehot_kernel,
        out_shape=jax.ShapeDtypeStruct((n_tokens, dim), emb_table.dtype),
        grid_spec=pltpu.PrefetchScalarGridSpec(
            num_scalar_prefetch=0,
            grid=grid,
            in_specs=[
                # Token ids for this tile; lane dim 1 == full array dim.
                pl.BlockSpec((tokens_per_tile, 1), lambda t: (t, 0)),
                # Full (small) table; constant block index -> copied to VMEM once.
                pl.BlockSpec((vocab, dim), lambda t: (0, 0)),
            ],
            out_specs=pl.BlockSpec((tokens_per_tile, dim), lambda t: (t, 0)),
        ),
        compiler_params=pltpu.CompilerParams(
            dimension_semantics=("parallel",),  # independent tiles; v7x megacore
            vmem_limit_bytes=vmem_limit_bytes,
        ),
    )(idx_col, emb_table)

    return out.reshape(bsz, seqlen, dim)


# ----------------------------------------------------------------------------
# Path 2: HBM-resident table — scalar-prefetched ids drive a per-row DMA gather.
# ----------------------------------------------------------------------------

def _embed_gather_kernel(ids_ref, row_ref, out_ref):
    del ids_ref  # indices are consumed by the index_maps (scalar prefetch)
    out_ref[...] = row_ref[...]


def _word_embedding_gather(idx, emb_table):
    bsz, seqlen = idx.shape
    vocab, dim = emb_table.shape
    n_tokens = bsz * seqlen

    idx_flat = idx.reshape(n_tokens).astype(jnp.int32)
    # Unit middle axis keeps every block's trailing two dims equal to the full
    # array dims, satisfying the (8,128) tiling rule for single-row blocks.
    emb3 = emb_table.reshape(vocab, 1, dim)

    out = pl.pallas_call(
        _embed_gather_kernel,
        out_shape=jax.ShapeDtypeStruct((n_tokens, 1, dim), emb_table.dtype),
        grid_spec=pltpu.PrefetchScalarGridSpec(
            num_scalar_prefetch=1,            # idx_flat -> SMEM, feeds index_maps
            grid=(n_tokens,),
            in_specs=[
                # Data-dependent row gather: DMA row ids[t] of the HBM table.
                pl.BlockSpec((1, 1, dim), lambda t, ids: (ids[t], 0, 0)),
            ],
            out_specs=pl.BlockSpec((1, 1, dim), lambda t, ids: (t, 0, 0)),
        ),
        compiler_params=pltpu.CompilerParams(
            dimension_semantics=("arbitrary",),
        ),
    )(idx_flat, emb3)

    return out.reshape(bsz, seqlen, dim)


# ----------------------------------------------------------------------------
# Dispatch wrapper (== WordEmbedding.forward).
# ----------------------------------------------------------------------------

def word_embedding(idx, emb_table, *, tokens_per_tile=None, force_path=None):
    """Pallas equivalent of nn.Embedding forward: idx [bsz, len] -> [bsz, len, dim]."""
    if force_path not in (None, "onehot", "gather"):
        raise ValueError("force_path must be None, 'onehot' or 'gather'")
    bsz, seqlen = idx.shape
    vocab, dim = emb_table.shape
    n_tokens = bsz * seqlen
    itemsize = jnp.dtype(emb_table.dtype).itemsize

    capacity = _vmem_capacity_bytes()
    budget = int(capacity * 0.70)  # headroom for compiler-internal scratch

    picked = None
    if force_path != "gather" and (vocab <= ONEHOT_MAX_VOCAB or force_path == "onehot"):
        picked = (tokens_per_tile if tokens_per_tile is not None
                  else _pick_tokens_per_tile(n_tokens, vocab, dim, itemsize, budget))

    if force_path == "onehot" and picked is None:
        raise ValueError(
            f"Embedding table {vocab}x{dim} "
            f"({vocab * dim * itemsize / 2**20:.1f} MiB) does not fit the "
            f"VMEM-resident one-hot path (budget {budget / 2**20:.1f} MiB); "
            "use the HBM gather path.")

    if picked is None:
        return _word_embedding_gather(idx, emb_table)

    footprint = (2 * vocab * dim * itemsize
                 + picked * _onehot_per_token_bytes(vocab, dim, itemsize))
    vmem_limit = int(min(capacity, max(footprint + (4 << 20), 16 << 20)))
    return _word_embedding_onehot(idx, emb_table, picked, vmem_limit)


if __name__ == "__main__":
    key = jax.random.PRNGKey(0)
    k_emb, k_idx, k_emb2, k_idx2 = jax.random.split(key, 4)

    # Small config consistent with the module (args.vocab_size / args.embedding_size);
    # no pretrained embeddings -> table ~ N(0,1), like nn.Embedding's default init.
    vocab_size, embedding_dim = 32, 128
    bsz, seqlen = 2, 8

    emb_table = jax.random.normal(k_emb, (vocab_size, embedding_dim), dtype=jnp.float32)
    idx = jax.random.randint(k_idx, (bsz, seqlen), 0, vocab_size, dtype=jnp.int32)

    out = jax.block_until_ready(word_embedding(idx, emb_table))
    ref = jnp.take(emb_table, idx, axis=0)
    assert out.shape == (bsz, seqlen, embedding_dim)
    assert jnp.allclose(out, ref), "one-hot path mismatch vs reference gather"

    # Larger vocab exercises the HBM-resident row-gather path (auto-dispatch).
    vocab_big = 2048
    emb_big = jax.random.normal(k_emb2, (vocab_big, embedding_dim), dtype=jnp.float32)
    idx_big = jax.random.randint(k_idx2, (bsz, seqlen), 0, vocab_big, dtype=jnp.int32)

    out_big = jax.block_until_ready(word_embedding(idx_big, emb_big))
    ref_big = jnp.take(emb_big, idx_big, axis=0)
    assert out_big.shape == (bsz, seqlen, embedding_dim)
    assert jnp.allclose(out_big, ref_big), "gather path mismatch vs reference gather"

    print("KERNEL_OK")
</pallas_src>

<mosaic_0001>
module attributes {stable_mosaic.version = 11 : i64} {
  func.func @_embed_onehot_kernel(%arg0: i32, %arg1: memref<16x1xi32, #tpu.memory_space<vmem>>, %arg2: memref<32x128xf32, #tpu.memory_space<vmem>>, %arg3: memref<16x128xf32, #tpu.memory_space<vmem>>) attributes {dimension_semantics = [#tpu.dimension_semantics<parallel>], iteration_bounds = array<i64: 1>, scalar_prefetch = 0 : i64, scratch_operands = 0 : i64, tpu.core_type = #tpu.core_type<tc>, window_params = [{transform_indices = @transform_0, window_bounds = array<i64: 16, 1>}, {pipeline_mode = #tpu.pipeline_mode<synchronous>, transform_indices = @transform_1, window_bounds = array<i64: 32, 128>}, {transform_indices = @transform_2, window_bounds = array<i64: 16, 128>}]} {
    %0 = tpu.iota {dimensions = array<i32: 1>} : vector<16x32xi32>
    %c0 = arith.constant 0 : index
    %c0_0 = arith.constant 0 : index
    %1 = vector.load %arg1[%c0, %c0_0] : memref<16x1xi32, #tpu.memory_space<vmem>>, vector<16x1xi32>
    %2 = vector.broadcast %1 : vector<16x1xi32> to vector<16x32xi32>
    %3 = arith.cmpi eq, %2, %0 : vector<16x32xi32>
    %4 = arith.extui %3 : vector<16x32xi1> to vector<16x32xi32>
    %5 = arith.sitofp %4 : vector<16x32xi32> to vector<16x32xf32>
    %c0_1 = arith.constant 0 : index
    %c0_2 = arith.constant 0 : index
    %6 = vector.load %arg2[%c0_1, %c0_2] : memref<32x128xf32, #tpu.memory_space<vmem>>, vector<32x128xf32>
    %cst = arith.constant dense<0.000000e+00> : vector<16x128xf32>
    %7 = tpu.matmul %5, %6, %cst {dimension_numbers = #tpu.dot_dimension_numbers<[1], [0], [0], [1], [0, 0, 1, 1], [], []>} : vector<16x32xf32>, vector<32x128xf32>, vector<16x128xf32> -> vector<16x128xf32>
    %c0_3 = arith.constant 0 : index
    %c0_4 = arith.constant 0 : index
    %8 = vector.load %arg3[%c0_3, %c0_4] : memref<16x128xf32, #tpu.memory_space<vmem>>, vector<16x128xf32>
    tpu.vector_store %arg3[%c0_3, %c0_4], %7 {strides = array<i32>} : memref<16x128xf32, #tpu.memory_space<vmem>>, vector<16x128xf32>,
    return
  }
  func.func @transform_0(%arg0: i32) -> (i32, i32) {
    %c0_i32 = arith.constant 0 : i32
    %c0_i32_0 = arith.constant 0 : i32
    return %arg0, %c0_i32 : i32, i32
  }
  func.func @transform_1(%arg0: i32) -> (i32, i32) {
    %c0_i32 = arith.constant 0 : i32
    %c0_i32_0 = arith.constant 0 : i32
    %c0_i32_1 = arith.constant 0 : i32
    return %c0_i32, %c0_i32_0 : i32, i32
  }
  func.func @transform_2(%arg0: i32) -> (i32, i32) {
    %c0_i32 = arith.constant 0 : i32
    %c0_i32_0 = arith.constant 0 : i32
    return %arg0, %c0_i32 : i32, i32
  }
}

</mosaic_0001>

<llo_original>
// kernel: tpu_custom_call.1
$region0: #{tpu_custom_call.1}
  #allocation0 [shape = 'u32[]', space=smem, size = 0x4, offset = 0x4, fixed_abs, tag = 'smem constant byte address 0x4 - core index']
  #allocation1 [shape = 'u32[72,128]{1,0:T(1,128)}', space=vmem, size = 0x9000, scoped, tag = 'internal scratch']
  %s0 = inlined_call_operand.vmem [shape: s32[16,1], index: 0, kind: input, shape index: {}]
  %s1 = inlined_call_operand.hbm [shape: f32[32,128], index: 1, kind: input, shape index: {}]
  %s2 = inlined_call_operand.hbm [shape: f32[16,128], index: 2, kind: output, shape index: {}]
  %s3 = sld [smem:[#allocation0]]
  $region22: #{tpu_custom_call.1} parent=0
    _
  %s5 = ssub.s32 1, %s3
  %s6 = scalar_select 0, %s5, %s3
  $region1: #{tpu_custom_call.1} parent=0
    #allocation2 [shape = 'u8[16384]{0}', space=vmem, size = 0x4000, scoped, tag = 'input window, operand 1, single buffered']
    #allocation3 [shape = 's32[1]{0}', space=sflag, size = 0x4, scoped, tag = 'scoped memory for tpu_custom_call.1']
    #allocation4 [shape = 's32[1]{0}', space=sflag, size = 0x4, scoped, tag = 'scoped memory for tpu_custom_call.1']
    #allocation5 [shape = 'u8[8192]{0}', space=vmem, size = 0x2000, scoped, tag = 'output window, operand 0, single buffered']
    %7 = vsyncpa [#allocation3], 0
    %8 = vsyncpa [#allocation4], 0
    // Predicated region
    $region2: #{tpu_custom_call.1} parent=1 // pred_check
      _
    $region3: #{tpu_custom_call.1} parent=1 // pred_check_branch
      %10 = sbr.rel (0) target = $region5
    $region4: #{tpu_custom_call.1} parent=1 // pred_region
      _
    $region5: #{tpu_custom_call.1} parent=1 // pred_fallthru
      _
    // Predicated region
    $region6: #{tpu_custom_call.1} parent=1 // pred_check
      _
    $region7: #{tpu_custom_call.1} parent=1 // pred_check_branch
      %12 = sbr.rel (0) target = $region9
    $region8: #{tpu_custom_call.1} parent=1 // pred_region
      %14 = vsyncadd [#allocation3], 0
      %s15 = sshll.u32 %s1, 4
      %s16 = int_to_ptr.hbm [resolvable:$true] %s15
      %s17 = sshll.u32 [#allocation2], 4
      %s18 = int_to_ptr.vmem [resolvable:$true] %s17
      %23 = dma.hbm_to_vmem [thread:$0]  %s16, 512, %s18, [#allocation3], 128, 128, 8
    $region9: #{tpu_custom_call.1} parent=1 // pred_fallthru
      _
    // Predicated region
    $region10: #{tpu_custom_call.1} parent=1 // pred_check
      _
    $region11: #{tpu_custom_call.1} parent=1 // pred_check_branch
      %25 = sbr.rel (0) target = $region13
    $region12: #{tpu_custom_call.1} parent=1 // pred_region
      %27 = dma.done [#allocation3], 512
    $region13: #{tpu_custom_call.1} parent=1 // pred_fallthru
      _
    %v28 = vlaneseq
    %v29 = vand.u32 %v28, 127
    %v30 = vld [vmem:[%s0] sm:$0xff]
    %v31 = vld [vmem:[%s0 + $0x8] sm:$0xff]
    %32 = vset.pattern.permute.xlu0 0
    %33 = vperm.xlu0 %32, %v30
    %v34 = vpop.permute.xlu0 %33
    %35 = vset.pattern.permute.xlu0 0
    %36 = vperm.xlu0 %35, %v31
    %v37 = vpop.permute.xlu0 %36
    %vm38 = vcmp.eq.s32.totalorder %v34, %v29
    %vm39 = vcmp.eq.s32.totalorder %v37, %v29
    %v40 = vsel %vm38, 1, 0
    %v41 = vsel %vm39, 1, 0
    %v42 = vcvt.s32.f32 %v40
    %v43 = vcvt.s32.f32 %v41
    %v44 = vld [vmem:[#allocation2] sm:$0xff]
    %v45 = vld [vmem:[#allocation2 + $0x8] sm:$0xff]
    %v46 = vld [vmem:[#allocation2 + $0x10] sm:$0xff]
    %v47 = vld [vmem:[#allocation2 + $0x18] sm:$0xff]
    %vm48 = vcmask 261120
    %v50 = vsel %vm48, %v42, 0
    %v53 = vsel %vm48, %v43, 0
    %55 = vmatpush.msra.mxu0 0.0
    %56 = vmatpush.msra.mxu0 0.0
    %57 = vmatpush.msra.mxu0 0.0
    %58 = vmatpush.msra.mxu0 0.0
    %59 = vmatpush.msra.mxu0 0.0
    %60 = vmatpush.msra.mxu0 0.0
    %61 = vmatpush.msra.mxu0 0.0
    %62 = vmatpush.msra.mxu0 0.0
    %63 = vmatpush.msra.mxu0 0.0
    %64 = vmatpush.msra.mxu0 0.0
    %65 = vmatpush.msra.mxu0 0.0
    %66 = vmatpush.msra.mxu0 0.0
    %67 = vmatpush.msra.mxu0 %v47
    %68 = vmatpush.msra.mxu0 %v46
    %69 = vmatpush.msra.mxu0 %v45
    %70 = vmatpush.msra.mxu0 %v44
    %71 = vmatmul.f32.gmra.mxu0 %v50
    %v72 = vpop.f32.mrf.mxu0
    %v73 = vadd.f32 0.0, %v72
    %74 = vmatmul.f32.gmra.mxu0 %v53
    %v75 = vpop.f32.mrf.mxu0
    %v76 = vadd.f32 0.0, %v75
    %77 = vdwg.mxu0
    %78 = vst [vmem:[#allocation5] sm:$0xff] %v73
    %79 = vst [vmem:[#allocation5 + $0x8] sm:$0xff] %v76
    // Predicated region
    $region14: #{tpu_custom_call.1} parent=1 // pred_check
      _
    $region15: #{tpu_custom_call.1} parent=1 // pred_check_branch
      %81 = sbr.rel (0) target = $region17
    $region16: #{tpu_custom_call.1} parent=1 // pred_region
      %83 = vsyncadd [#allocation4], 0
      %s84 = sshll.u32 [#allocation5], 4
      %s85 = int_to_ptr.vmem [resolvable:$true] %s84
      %s86 = sshll.u32 %s2, 4
      %s87 = int_to_ptr.hbm [resolvable:$true] %s86
      %92 = dma.vmem_to_hbm [thread:$0]  %s85, 256, %s87, [#allocation4], 128, 128, 8
    $region17: #{tpu_custom_call.1} parent=1 // pred_fallthru
      _
    // Predicated region
    $region18: #{tpu_custom_call.1} parent=1 // pred_check
      _
    $region19: #{tpu_custom_call.1} parent=1 // pred_check_branch
      %94 = sbr.rel (0) target = $region21
    $region20: #{tpu_custom_call.1} parent=1 // pred_region
      %96 = dma.done [#allocation4], 256
    $region21: #{tpu_custom_call.1} parent=1 // pred_fallthru
      _
    %97 = vsyncpa [#allocation3], 1
    %98 = vsyncpa [#allocation4], 1

</llo_original>
